<compile_context>
chip_gen: v7x
topology: tpu7x:2x2x1
jax: 0.10.0
libtpu: 0.0.40
codegen_flags: <defaults>
</compile_context>

<pallas_src>
import functools

import jax
import jax.numpy as jnp
from jax.experimental import pallas as pl
from jax.experimental.pallas import tpu as pltpu


# ---------------------------------------------------------------------------
# Kernel: 3x3 SAME conv (as 3 accumulated MXU dots) + per-step BN partials.
# ---------------------------------------------------------------------------
def _conv_stats_kernel(*refs, h_img, mxu_dtype, fuse_input_act):
    # fuse_input_act=False: (x, B, conv_out, stats)
    # fuse_input_act=True : (x, B, in_scale, in_shift, conv_out, stats)
    if fuse_input_act:
        x_ref, b_ref, s_ref, t_ref, conv_ref, stats_ref = refs
    else:
        x_ref, b_ref, conv_ref, stats_ref = refs

    x = x_ref[0].astype(jnp.float32)              # (M, W*Cin), M = G*H rows
    if fuse_input_act:
        # Previous stage's folded BN + ReLU, applied on the fly (scale/shift
        # pre-tiled to the packed (w, c) lane layout).
        x = jnp.maximum(x * s_ref[...] + t_ref[...], 0.0)

    m, wc_in = x.shape
    # Row index within each image (G images stacked along the sublane axis).
    row = jax.lax.broadcasted_iota(jnp.int32, (m, wc_in), 0) % h_img
    zrow = jnp.zeros((1, wc_in), jnp.float32)
    # "up" holds x[r-1] at row r, "down" holds x[r+1]; rows whose neighbour
    # lies across an image boundary (vertical SAME padding) are zeroed by the
    # iota mask.  NOTE: pltpu.roll(x, +/-1, axis=0) would move these shifts to
    # the otherwise-idle XLU slot; kept as slice+concat for robustness at M=32.
    up = jnp.where(row == 0, 0.0,
                   jnp.concatenate([zrow, x[:m - 1]], axis=0))
    down = jnp.where(row == h_img - 1, 0.0,
                     jnp.concatenate([x[1:], zrow], axis=0))

    # Three accumulated MXU dots against the ky sub-blocks of the
    # block-Toeplitz weight (horizontal padding already folded into B).
    # No conv bias: training-mode BatchNorm cancels it algebraically.
    acc = jnp.dot(up.astype(mxu_dtype), b_ref[0],
                  preferred_element_type=jnp.float32)
    acc = acc + jnp.dot(x.astype(mxu_dtype), b_ref[1],
                        preferred_element_type=jnp.float32)
    acc = acc + jnp.dot(down.astype(mxu_dtype), b_ref[2],
                        preferred_element_type=jnp.float32)

    conv_ref[0] = acc.astype(conv_ref.dtype)      # lane-dense (M, W*Cout) store
    # f32 per-step BN partials (per packed (w, c) lane; folded to per-channel
    # on the host where it is only Cout-sized).
    stats_ref[0] = jnp.concatenate(
        [jnp.sum(acc, axis=0, keepdims=True),
         jnp.sum(acc * acc, axis=0, keepdims=True)], axis=0)


# ---------------------------------------------------------------------------
# pallas_call wrapper
# ---------------------------------------------------------------------------
_COMPILER_PARAMS = pltpu.CompilerParams(
    dimension_semantics=("parallel",),        # group axis shards across TCs (v7x)
    vmem_limit_bytes=32 * 1024 * 1024,        # fits v5e/v6e (128M) and v7x (64M)
)


def _conv_bn_stats(x_packed, b_mat, *, h_img, scale_shift=None,
                   out_dtype=jnp.float32, mxu_dtype=jnp.bfloat16):
    """x_packed: (n_groups, G*H, W*Cin).  b_mat: (3, W*Cin, W*Cout) in mxu_dtype.
    Returns (conv_out (n_groups, G*H, W*Cout), stats (n_groups, 2, W*Cout))."""
    ng, m, wc_in = x_packed.shape
    _, _, wc_out = b_mat.shape
    fuse = scale_shift is not None

    in_specs = [pl.BlockSpec((1, m, wc_in), lambda g: (g, 0, 0)),
                pl.BlockSpec((3, wc_in, wc_out), lambda g: (0, 0, 0))]
    args = [x_packed, b_mat]
    if fuse:
        in_specs += [pl.BlockSpec((1, wc_in), lambda g: (0, 0)),
                     pl.BlockSpec((1, wc_in), lambda g: (0, 0))]
        args += list(scale_shift)

    kernel = functools.partial(_conv_stats_kernel, h_img=h_img,
                               mxu_dtype=mxu_dtype, fuse_input_act=fuse)
    return pl.pallas_call(
        kernel,
        grid=(ng,),
        in_specs=in_specs,
        out_specs=[pl.BlockSpec((1, m, wc_out), lambda g: (g, 0, 0)),
                   pl.BlockSpec((1, 2, wc_out), lambda g: (g, 0, 0))],
        out_shape=[jax.ShapeDtypeStruct((ng, m, wc_out), out_dtype),
                   jax.ShapeDtypeStruct((ng, 2, wc_out), jnp.float32)],
        compiler_params=_COMPILER_PARAMS,
    )(*args)


# ---------------------------------------------------------------------------
# Host-side helpers (tiny, run once per forward)
# ---------------------------------------------------------------------------
def pack_conv_weights(w_hwio, w_img, dtype=jnp.bfloat16):
    """HWIO (3,3,Cin,Cout) weights -> (3, W*Cin, W*Cout): per-ky horizontal
    block-Toeplitz matrices so the conv becomes 3 accumulated matmuls."""
    kh, kw, cin, cout = w_hwio.shape
    j = jnp.arange(w_img)[:, None]            # input column
    w = jnp.arange(w_img)[None, :]            # output column
    kx = j - w + 1                            # horizontal tap index
    valid = (kx >= 0) & (kx < kw)             # out-of-band == zero padding
    blocks = []
    for ky in range(kh):
        taps = w_hwio[ky][jnp.clip(kx, 0, kw - 1)]          # (W, W, Cin, Cout)
        taps = jnp.where(valid[:, :, None, None], taps, 0.0)
        blocks.append(jnp.transpose(taps, (0, 2, 1, 3))
                      .reshape(w_img * cin, w_img * cout))
    return jnp.stack(blocks, axis=0).astype(dtype)           # (3, W*Cin, W*Cout)


def _bn_scale_shift(stats, gamma, beta, count, cout, eps):
    """Per-group (sum, sumsq) partials -> per-channel scale/shift, tiled to the
    packed (w, c) lane layout."""
    wc_out = stats.shape[-1]
    w_img = wc_out // cout
    tot = jnp.sum(stats, axis=0).reshape(2, w_img, cout).sum(axis=1)  # (2, Cout)
    mean = tot[0] / count
    # E[x^2]-E[x]^2 in f32; clamp against cancellation.  TODO(synk): switch to
    # shifted sums / Welford if inputs are far from zero-mean at large sizes.
    var = jnp.maximum(tot[1] / count - mean * mean, 0.0)
    scale = gamma * jax.lax.rsqrt(var + eps)
    shift = beta - mean * scale
    return (jnp.tile(scale, w_img).reshape(1, wc_out),
            jnp.tile(shift, w_img).reshape(1, wc_out))


def _images_per_step(n, h, target_rows=256):
    """Pack G images per grid step so the MXU M dim is ~target_rows."""
    g = max(1, min(n, target_rows // max(h, 1)))
    while n % g:                               # require even division
        g -= 1
    return g


def model1_forward(x_nchw, params, eps=1e-5, mxu_dtype=jnp.bfloat16):
    n, cin, h, w_img = x_nchw.shape
    cout = params["w1"].shape[-1]

    g = _images_per_step(n, h)
    ng = n // g
    m = g * h
    inter_dtype = jnp.bfloat16 if mxu_dtype == jnp.bfloat16 else jnp.float32

    # NCHW -> packed (n_groups, G*H, W*Cin); pure reshape/transpose.
    x = jnp.transpose(x_nchw, (0, 2, 3, 1)).reshape(ng, m, w_img * cin)

    b1 = pack_conv_weights(params["w1"], w_img, mxu_dtype)   # (3, W*Cin,  W*Cout)
    b2 = pack_conv_weights(params["w2"], w_img, mxu_dtype)   # (3, W*Cout, W*Cout)
    count = n * h * w_img

    # Stage 1: conv + per-group BN partials (bias dropped: cancelled by BN).
    conv1, stats1 = _conv_bn_stats(x, b1, h_img=h,
                                   out_dtype=inter_dtype, mxu_dtype=mxu_dtype)
    s1, t1 = _bn_scale_shift(stats1, params["g1"], params["be1"], count, cout, eps)

    # Stage 2: conv with stage-1's folded BN+ReLU fused into its input path.
    conv2, stats2 = _conv_bn_stats(conv1, b2, h_img=h, scale_shift=(s1, t1),
                                   out_dtype=jnp.float32, mxu_dtype=mxu_dtype)
    s2, t2 = _bn_scale_shift(stats2, params["g2"], params["be2"], count, cout, eps)

    # Final BN + ReLU and the NCHW unpack stay in XLA: the elementwise
    # scale/shift/ReLU fuses with the transpose (no extra kernel launch / HBM pass).
    out = jnp.maximum(conv2 * s2 + t2, 0.0)                  # (ng, G*H, W*Cout)
    out = out.reshape(n, h, w_img, cout)
    return jnp.transpose(out, (0, 3, 1, 2))                  # back to NCHW


# ---------------------------------------------------------------------------
# Pure-JAX f32 reference (conv with bias + training-mode BN + ReLU) and params
# ---------------------------------------------------------------------------
def _reference_forward(x_nchw, params, eps=1e-5):
    def stage(x, w_hwio, b, gmm, be):
        y = jax.lax.conv_general_dilated(
            x, w_hwio, window_strides=(1, 1), padding="SAME",
            dimension_numbers=("NHWC", "HWIO", "NHWC")) + b
        mean = jnp.mean(y, axis=(0, 1, 2), keepdims=True)
        var = jnp.mean((y - mean) ** 2, axis=(0, 1, 2), keepdims=True)
        y = (y - mean) * jax.lax.rsqrt(var + eps) * gmm + be
        return jnp.maximum(y, 0.0)

    x = jnp.transpose(x_nchw, (0, 2, 3, 1))
    out = stage(x, params["w1"], params["b1"], params["g1"], params["be1"])
    out = stage(out, params["w2"], params["b2"], params["g2"], params["be2"])
    return jnp.transpose(out, (0, 3, 1, 2))


def init_params(key, ch_in, ch_out):
    ks = jax.random.split(key, 6)
    # Conv weights in PyTorch (Cout, Cin, kh, kw) layout, then -> HWIO.
    w1 = jax.random.normal(ks[0], (ch_out, ch_in, 3, 3), jnp.float32) * 0.1
    b1 = jax.random.normal(ks[1], (ch_out,), jnp.float32) * 0.1
    w2 = jax.random.normal(ks[2], (ch_out, ch_out, 3, 3), jnp.float32) * 0.1
    b2 = jax.random.normal(ks[3], (ch_out,), jnp.float32) * 0.1
    g1 = 1.0 + 0.1 * jax.random.normal(ks[4], (ch_out,), jnp.float32)
    g2 = 1.0 + 0.1 * jax.random.normal(ks[5], (ch_out,), jnp.float32)
    return {
        "w1": jnp.transpose(w1, (2, 3, 1, 0)), "b1": b1,
        "g1": g1, "be1": jnp.zeros((ch_out,), jnp.float32),
        "w2": jnp.transpose(w2, (2, 3, 1, 0)), "b2": b2,
        "g2": g2, "be2": jnp.zeros((ch_out,), jnp.float32),
    }


if __name__ == "__main__":
    key = jax.random.PRNGKey(0)
    k_x, k_p = jax.random.split(key)

    N, C_IN, C_OUT, H, W = 2, 4, 8, 16, 16
    x = jax.random.normal(k_x, (N, C_IN, H, W), jnp.float32)
    params = init_params(k_p, C_IN, C_OUT)

    out = jax.block_until_ready(jax.jit(model1_forward)(x, params))
    ref = jax.block_until_ready(_reference_forward(x, params))

    assert out.shape == (N, C_OUT, H, W), out.shape
    err = jnp.abs(out - ref)
    max_err = float(jnp.max(err))
    mean_err = float(jnp.mean(err))
    # Tolerance loosened vs the all-f32 version: bf16 MXU inputs and a bf16
    # stage-1 intermediate introduce ~1e-2-scale rounding (BN re-normalizes).
    assert max_err < 8e-2 and mean_err < 2e-2, (max_err, mean_err)
    print("KERNEL_OK")
</pallas_src>

<mosaic_0001>
module attributes {stable_mosaic.version = 11 : i64} {
  func.func @_conv_stats_kernel(%arg0: i32, %arg1: memref<1x32x64xf32, #tpu.memory_space<vmem>>, %arg2: memref<3x64x128xbf16, #tpu.memory_space<vmem>>, %arg3: memref<1x32x128xbf16, #tpu.memory_space<vmem>>, %arg4: memref<1x2x128xf32, #tpu.memory_space<vmem>>) attributes {dimension_semantics = [#tpu.dimension_semantics<parallel>], iteration_bounds = array<i64: 1>, scalar_prefetch = 0 : i64, scratch_operands = 0 : i64, tpu.core_type = #tpu.core_type<tc>, window_params = [{transform_indices = @transform_0, window_bounds = array<i64: 1, 32, 64>}, {pipeline_mode = #tpu.pipeline_mode<synchronous>, transform_indices = @transform_1, window_bounds = array<i64: 3, 64, 128>}, {transform_indices = @transform_2, window_bounds = array<i64: 1, 32, 128>}, {transform_indices = @transform_3, window_bounds = array<i64: 1, 2, 128>}]} {
    %c0 = arith.constant 0 : index
    %c0_0 = arith.constant 0 : index
    %c0_1 = arith.constant 0 : index
    %0 = vector.load %arg1[%c0, %c0_0, %c0_1] : memref<1x32x64xf32, #tpu.memory_space<vmem>>, vector<1x32x64xf32>
    %1 = vector.shape_cast %0 : vector<1x32x64xf32> to vector<32x64xf32>
    %2 = tpu.iota {dimensions = array<i32: 0>} : vector<32x64xi32>
    %c16_i32 = arith.constant 16 : i32
    %c0_i32 = arith.constant 0 : i32
    %3 = arith.cmpi eq, %c16_i32, %c0_i32 : i32
    %c1_i32 = arith.constant 1 : i32
    %4 = arith.select %3, %c1_i32, %c16_i32 : i32
    %5 = vector.broadcast %4 : i32 to vector<32x64xi32>
    %6 = arith.remsi %2, %5 : vector<32x64xi32>
    %c0_i32_2 = arith.constant 0 : i32
    %7 = vector.broadcast %c0_i32_2 : i32 to vector<32x64xi32>
    %8 = arith.cmpi ne, %6, %7 : vector<32x64xi32>
    %c0_i32_3 = arith.constant 0 : i32
    %9 = vector.broadcast %c0_i32_3 : i32 to vector<32x64xi32>
    %10 = arith.cmpi slt, %6, %9 : vector<32x64xi32>
    %c0_i32_4 = arith.constant 0 : i32
    %11 = arith.cmpi slt, %4, %c0_i32_4 : i32
    %12 = vector.broadcast %11 : i1 to vector<32x64xi1>
    %13 = vector.broadcast %12 : vector<32x64xi1> to vector<32x64xi1>
    %14 = arith.xori %10, %13 : vector<32x64xi1>
    %15 = arith.andi %14, %8 : vector<32x64xi1>
    %16 = vector.broadcast %4 : i32 to vector<32x64xi32>
    %17 = arith.addi %6, %16 : vector<32x64xi32>
    %18 = arith.select %15, %17, %6 : vector<32x64xi1>, vector<32x64xi32>
    %cst = arith.constant 0.000000e+00 : f32
    %19 = vector.broadcast %cst : f32 to vector<1x64xf32>
    %c0_i32_5 = arith.constant 0 : i32
    %20 = vector.broadcast %c0_i32_5 : i32 to vector<32x64xi32>
    %21 = arith.cmpi eq, %18, %20 : vector<32x64xi32>
    %22 = vector.extract_strided_slice %1 {offsets = [0, 0], sizes = [31, 64], strides = [1, 1]} : vector<32x64xf32> to vector<31x64xf32>
    %23 = tpu.concatenate %19, %22 in 0 : vector<1x64xf32>, vector<31x64xf32> -> vector<32x64xf32>
    %cst_6 = arith.constant 0.000000e+00 : f32
    %24 = vector.broadcast %cst_6 : f32 to vector<32x64xf32>
    %25 = arith.select %21, %24, %23 : vector<32x64xi1>, vector<32x64xf32>
    %c15_i32 = arith.constant 15 : i32
    %26 = vector.broadcast %c15_i32 : i32 to vector<32x64xi32>
    %27 = arith.cmpi eq, %18, %26 : vector<32x64xi32>
    %28 = vector.extract_strided_slice %1 {offsets = [1, 0], sizes = [31, 64], strides = [1, 1]} : vector<32x64xf32> to vector<31x64xf32>
    %29 = tpu.concatenate %28, %19 in 0 : vector<31x64xf32>, vector<1x64xf32> -> vector<32x64xf32>
    %cst_7 = arith.constant 0.000000e+00 : f32
    %30 = vector.broadcast %cst_7 : f32 to vector<32x64xf32>
    %31 = arith.select %27, %30, %29 : vector<32x64xi1>, vector<32x64xf32>
    %32 = arith.truncf %25 : vector<32x64xf32> to vector<32x64xbf16>
    %c0_8 = arith.constant 0 : index
    %c0_9 = arith.constant 0 : index
    %c0_10 = arith.constant 0 : index
    %33 = vector.load %arg2[%c0_8, %c0_9, %c0_10] : memref<3x64x128xbf16, #tpu.memory_space<vmem>>, vector<1x64x128xbf16>
    %34 = vector.shape_cast %33 : vector<1x64x128xbf16> to vector<64x128xbf16>
    %cst_11 = arith.constant dense<0.000000e+00> : vector<32x128xf32>
    %35 = tpu.matmul %32, %34, %cst_11 {dimension_numbers = #tpu.dot_dimension_numbers<[1], [0], [0], [1], [0, 0, 1, 1], [], []>} : vector<32x64xbf16>, vector<64x128xbf16>, vector<32x128xf32> -> vector<32x128xf32>
    %36 = arith.truncf %1 : vector<32x64xf32> to vector<32x64xbf16>
    %c1 = arith.constant 1 : index
    %c0_12 = arith.constant 0 : index
    %c0_13 = arith.constant 0 : index
    %37 = vector.load %arg2[%c1, %c0_12, %c0_13] : memref<3x64x128xbf16, #tpu.memory_space<vmem>>, vector<1x64x128xbf16>
    %38 = vector.shape_cast %37 : vector<1x64x128xbf16> to vector<64x128xbf16>
    %cst_14 = arith.constant dense<0.000000e+00> : vector<32x128xf32>
    %39 = tpu.matmul %36, %38, %cst_14 {dimension_numbers = #tpu.dot_dimension_numbers<[1], [0], [0], [1], [0, 0, 1, 1], [], []>} : vector<32x64xbf16>, vector<64x128xbf16>, vector<32x128xf32> -> vector<32x128xf32>
    %40 = arith.addf %35, %39 : vector<32x128xf32>
    %41 = arith.truncf %31 : vector<32x64xf32> to vector<32x64xbf16>
    %c2 = arith.constant 2 : index
    %c0_15 = arith.constant 0 : index
    %c0_16 = arith.constant 0 : index
    %42 = vector.load %arg2[%c2, %c0_15, %c0_16] : memref<3x64x128xbf16, #tpu.memory_space<vmem>>, vector<1x64x128xbf16>
    %43 = vector.shape_cast %42 : vector<1x64x128xbf16> to vector<64x128xbf16>
    %cst_17 = arith.constant dense<0.000000e+00> : vector<32x128xf32>
    %44 = tpu.matmul %41, %43, %cst_17 {dimension_numbers = #tpu.dot_dimension_numbers<[1], [0], [0], [1], [0, 0, 1, 1], [], []>} : vector<32x64xbf16>, vector<64x128xbf16>, vector<32x128xf32> -> vector<32x128xf32>
    %45 = arith.addf %40, %44 : vector<32x128xf32>
    %46 = arith.truncf %45 : vector<32x128xf32> to vector<32x128xbf16>
    %c0_18 = arith.constant 0 : index
    %c0_19 = arith.constant 0 : index
    %c0_20 = arith.constant 0 : index
    %47 = vector.load %arg3[%c0_18, %c0_19, %c0_20] : memref<1x32x128xbf16, #tpu.memory_space<vmem>>, vector<1x32x128xbf16>
    %48 = vector.shape_cast %47 : vector<1x32x128xbf16> to vector<32x128xbf16>
    %49 = vector.shape_cast %46 : vector<32x128xbf16> to vector<1x32x128xbf16>
    tpu.vector_store %arg3[%c0_18, %c0_19, %c0_20], %49 {strides = array<i32>} : memref<1x32x128xbf16, #tpu.memory_space<vmem>>, vector<1x32x128xbf16>,
    %cst_21 = arith.constant dense<0.000000e+00> : vector<128xf32>
    %50 = vector.multi_reduction <add>, %45, %cst_21 [0] : vector<32x128xf32> to vector<128xf32>
    %51 = vector.shape_cast %50 : vector<128xf32> to vector<1x128xf32>
    %52 = arith.mulf %45, %45 : vector<32x128xf32>
    %cst_22 = arith.constant dense<0.000000e+00> : vector<128xf32>
    %53 = vector.multi_reduction <add>, %52, %cst_22 [0] : vector<32x128xf32> to vector<128xf32>
    %54 = vector.shape_cast %53 : vector<128xf32> to vector<1x128xf32>
    %55 = tpu.concatenate %51, %54 in 0 : vector<1x128xf32>, vector<1x128xf32> -> vector<2x128xf32>
    %c0_23 = arith.constant 0 : index
    %c0_24 = arith.constant 0 : index
    %c0_25 = arith.constant 0 : index
    %56 = vector.load %arg4[%c0_23, %c0_24, %c0_25] : memref<1x2x128xf32, #tpu.memory_space<vmem>>, vector<1x2x128xf32>
    %57 = vector.shape_cast %56 : vector<1x2x128xf32> to vector<2x128xf32>
    %58 = vector.shape_cast %55 : vector<2x128xf32> to vector<1x2x128xf32>
    tpu.vector_store %arg4[%c0_23, %c0_24, %c0_25], %58 {strides = array<i32>} : memref<1x2x128xf32, #tpu.memory_space<vmem>>, vector<1x2x128xf32>,
    return
  }
  func.func @transform_0(%arg0: i32) -> (i32, i32, i32) {
    %c0_i32 = arith.constant 0 : i32
    %c0_i32_0 = arith.constant 0 : i32
    %c0_i32_1 = arith.constant 0 : i32
    return %arg0, %c0_i32, %c0_i32_0 : i32, i32, i32
  }
  func.func @transform_1(%arg0: i32) -> (i32, i32, i32) {
    %c0_i32 = arith.constant 0 : i32
    %c0_i32_0 = arith.constant 0 : i32
    %c0_i32_1 = arith.constant 0 : i32
    %c0_i32_2 = arith.constant 0 : i32
    return %c0_i32, %c0_i32_0, %c0_i32_1 : i32, i32, i32
  }
  func.func @transform_2(%arg0: i32) -> (i32, i32, i32) {
    %c0_i32 = arith.constant 0 : i32
    %c0_i32_0 = arith.constant 0 : i32
    %c0_i32_1 = arith.constant 0 : i32
    return %arg0, %c0_i32, %c0_i32_0 : i32, i32, i32
  }
  func.func @transform_3(%arg0: i32) -> (i32, i32, i32) {
    %c0_i32 = arith.constant 0 : i32
    %c0_i32_0 = arith.constant 0 : i32
    %c0_i32_1 = arith.constant 0 : i32
    return %arg0, %c0_i32, %c0_i32_0 : i32, i32, i32
  }
}

module attributes {stable_mosaic.version = 11 : i64} {
  func.func @_conv_stats_kernel(%arg0: i32, %arg1: memref<1x32x128xbf16, #tpu.memory_space<vmem>>, %arg2: memref<3x128x128xbf16, #tpu.memory_space<vmem>>, %arg3: memref<1x128xf32, #tpu.memory_space<vmem>>, %arg4: memref<1x128xf32, #tpu.memory_space<vmem>>, %arg5: memref<1x32x128xf32, #tpu.memory_space<vmem>>, %arg6: memref<1x2x128xf32, #tpu.memory_space<vmem>>) attributes {dimension_semantics = [#tpu.dimension_semantics<parallel>], iteration_bounds = array<i64: 1>, scalar_prefetch = 0 : i64, scratch_operands = 0 : i64, tpu.core_type = #tpu.core_type<tc>, window_params = [{transform_indices = @transform_0, window_bounds = array<i64: 1, 32, 128>}, {pipeline_mode = #tpu.pipeline_mode<synchronous>, transform_indices = @transform_1, window_bounds = array<i64: 3, 128, 128>}, {pipeline_mode = #tpu.pipeline_mode<synchronous>, transform_indices = @transform_2, window_bounds = array<i64: 1, 128>}, {pipeline_mode = #tpu.pipeline_mode<synchronous>, transform_indices = @transform_3, window_bounds = array<i64: 1, 128>}, {transform_indices = @transform_4, window_bounds = array<i64: 1, 32, 128>}, {transform_indices = @transform_5, window_bounds = array<i64: 1, 2, 128>}]} {
    %c0 = arith.constant 0 : index
    %c0_0 = arith.constant 0 : index
    %c0_1 = arith.constant 0 : index
    %0 = vector.load %arg1[%c0, %c0_0, %c0_1] : memref<1x32x128xbf16, #tpu.memory_space<vmem>>, vector<1x32x128xbf16>
    %1 = vector.shape_cast %0 : vector<1x32x128xbf16> to vector<32x128xbf16>
    %2 = arith.extf %1 : vector<32x128xbf16> to vector<32x128xf32>
    %c0_2 = arith.constant 0 : index
    %c0_3 = arith.constant 0 : index
    %3 = vector.load %arg3[%c0_2, %c0_3] : memref<1x128xf32, #tpu.memory_space<vmem>>, vector<1x128xf32>
    %4 = vector.broadcast %3 : vector<1x128xf32> to vector<32x128xf32>
    %5 = arith.mulf %2, %4 : vector<32x128xf32>
    %c0_4 = arith.constant 0 : index
    %c0_5 = arith.constant 0 : index
    %6 = vector.load %arg4[%c0_4, %c0_5] : memref<1x128xf32, #tpu.memory_space<vmem>>, vector<1x128xf32>
    %7 = vector.broadcast %6 : vector<1x128xf32> to vector<32x128xf32>
    %8 = arith.addf %5, %7 : vector<32x128xf32>
    %cst = arith.constant 0.000000e+00 : f32
    %9 = vector.broadcast %cst : f32 to vector<32x128xf32>
    %10 = arith.maximumf %8, %9 : vector<32x128xf32>
    %11 = tpu.iota {dimensions = array<i32: 0>} : vector<32x128xi32>
    %c16_i32 = arith.constant 16 : i32
    %c0_i32 = arith.constant 0 : i32
    %12 = arith.cmpi eq, %c16_i32, %c0_i32 : i32
    %c1_i32 = arith.constant 1 : i32
    %13 = arith.select %12, %c1_i32, %c16_i32 : i32
    %14 = vector.broadcast %13 : i32 to vector<32x128xi32>
    %15 = arith.remsi %11, %14 : vector<32x128xi32>
    %c0_i32_6 = arith.constant 0 : i32
    %16 = vector.broadcast %c0_i32_6 : i32 to vector<32x128xi32>
    %17 = arith.cmpi ne, %15, %16 : vector<32x128xi32>
    %c0_i32_7 = arith.constant 0 : i32
    %18 = vector.broadcast %c0_i32_7 : i32 to vector<32x128xi32>
    %19 = arith.cmpi slt, %15, %18 : vector<32x128xi32>
    %c0_i32_8 = arith.constant 0 : i32
    %20 = arith.cmpi slt, %13, %c0_i32_8 : i32
    %21 = vector.broadcast %20 : i1 to vector<32x128xi1>
    %22 = vector.broadcast %21 : vector<32x128xi1> to vector<32x128xi1>
    %23 = arith.xori %19, %22 : vector<32x128xi1>
    %24 = arith.andi %23, %17 : vector<32x128xi1>
    %25 = vector.broadcast %13 : i32 to vector<32x128xi32>
    %26 = arith.addi %15, %25 : vector<32x128xi32>
    %27 = arith.select %24, %26, %15 : vector<32x128xi1>, vector<32x128xi32>
    %cst_9 = arith.constant 0.000000e+00 : f32
    %28 = vector.broadcast %cst_9 : f32 to vector<1x128xf32>
    %c0_i32_10 = arith.constant 0 : i32
    %29 = vector.broadcast %c0_i32_10 : i32 to vector<32x128xi32>
    %30 = arith.cmpi eq, %27, %29 : vector<32x128xi32>
    %31 = vector.extract_strided_slice %10 {offsets = [0, 0], sizes = [31, 128], strides = [1, 1]} : vector<32x128xf32> to vector<31x128xf32>
    %32 = tpu.concatenate %28, %31 in 0 : vector<1x128xf32>, vector<31x128xf32> -> vector<32x128xf32>
    %cst_11 = arith.constant 0.000000e+00 : f32
    %33 = vector.broadcast %cst_11 : f32 to vector<32x128xf32>
    %34 = arith.select %30, %33, %32 : vector<32x128xi1>, vector<32x128xf32>
    %c15_i32 = arith.constant 15 : i32
    %35 = vector.broadcast %c15_i32 : i32 to vector<32x128xi32>
    %36 = arith.cmpi eq, %27, %35 : vector<32x128xi32>
    %37 = vector.extract_strided_slice %10 {offsets = [1, 0], sizes = [31, 128], strides = [1, 1]} : vector<32x128xf32> to vector<31x128xf32>
    %38 = tpu.concatenate %37, %28 in 0 : vector<31x128xf32>, vector<1x128xf32> -> vector<32x128xf32>
    %cst_12 = arith.constant 0.000000e+00 : f32
    %39 = vector.broadcast %cst_12 : f32 to vector<32x128xf32>
    %40 = arith.select %36, %39, %38 : vector<32x128xi1>, vector<32x128xf32>
    %41 = arith.truncf %34 : vector<32x128xf32> to vector<32x128xbf16>
    %c0_13 = arith.constant 0 : index
    %c0_14 = arith.constant 0 : index
    %c0_15 = arith.constant 0 : index
    %42 = vector.load %arg2[%c0_13, %c0_14, %c0_15] : memref<3x128x128xbf16, #tpu.memory_space<vmem>>, vector<1x128x128xbf16>
    %43 = vector.shape_cast %42 : vector<1x128x128xbf16> to vector<128x128xbf16>
    %cst_16 = arith.constant dense<0.000000e+00> : vector<32x128xf32>
    %44 = tpu.matmul %41, %43, %cst_16 {dimension_numbers = #tpu.dot_dimension_numbers<[1], [0], [0], [1], [0, 0, 1, 1], [], []>} : vector<32x128xbf16>, vector<128x128xbf16>, vector<32x128xf32> -> vector<32x128xf32>
    %45 = arith.truncf %10 : vector<32x128xf32> to vector<32x128xbf16>
    %c1 = arith.constant 1 : index
    %c0_17 = arith.constant 0 : index
    %c0_18 = arith.constant 0 : index
    %46 = vector.load %arg2[%c1, %c0_17, %c0_18] : memref<3x128x128xbf16, #tpu.memory_space<vmem>>, vector<1x128x128xbf16>
    %47 = vector.shape_cast %46 : vector<1x128x128xbf16> to vector<128x128xbf16>
    %cst_19 = arith.constant dense<0.000000e+00> : vector<32x128xf32>
    %48 = tpu.matmul %45, %47, %cst_19 {dimension_numbers = #tpu.dot_dimension_numbers<[1], [0], [0], [1], [0, 0, 1, 1], [], []>} : vector<32x128xbf16>, vector<128x128xbf16>, vector<32x128xf32> -> vector<32x128xf32>
    %49 = arith.addf %44, %48 : vector<32x128xf32>
    %50 = arith.truncf %40 : vector<32x128xf32> to vector<32x128xbf16>
    %c2 = arith.constant 2 : index
    %c0_20 = arith.constant 0 : index
    %c0_21 = arith.constant 0 : index
    %51 = vector.load %arg2[%c2, %c0_20, %c0_21] : memref<3x128x128xbf16, #tpu.memory_space<vmem>>, vector<1x128x128xbf16>
    %52 = vector.shape_cast %51 : vector<1x128x128xbf16> to vector<128x128xbf16>
    %cst_22 = arith.constant dense<0.000000e+00> : vector<32x128xf32>
    %53 = tpu.matmul %50, %52, %cst_22 {dimension_numbers = #tpu.dot_dimension_numbers<[1], [0], [0], [1], [0, 0, 1, 1], [], []>} : vector<32x128xbf16>, vector<128x128xbf16>, vector<32x128xf32> -> vector<32x128xf32>
    %54 = arith.addf %49, %53 : vector<32x128xf32>
    %c0_23 = arith.constant 0 : index
    %c0_24 = arith.constant 0 : index
    %c0_25 = arith.constant 0 : index
    %55 = vector.load %arg5[%c0_23, %c0_24, %c0_25] : memref<1x32x128xf32, #tpu.memory_space<vmem>>, vector<1x32x128xf32>
    %56 = vector.shape_cast %55 : vector<1x32x128xf32> to vector<32x128xf32>
    %57 = vector.shape_cast %54 : vector<32x128xf32> to vector<1x32x128xf32>
    tpu.vector_store %arg5[%c0_23, %c0_24, %c0_25], %57 {strides = array<i32>} : memref<1x32x128xf32, #tpu.memory_space<vmem>>, vector<1x32x128xf32>,
    %cst_26 = arith.constant dense<0.000000e+00> : vector<128xf32>
    %58 = vector.multi_reduction <add>, %54, %cst_26 [0] : vector<32x128xf32> to vector<128xf32>
    %59 = vector.shape_cast %58 : vector<128xf32> to vector<1x128xf32>
    %60 = arith.mulf %54, %54 : vector<32x128xf32>
    %cst_27 = arith.constant dense<0.000000e+00> : vector<128xf32>
    %61 = vector.multi_reduction <add>, %60, %cst_27 [0] : vector<32x128xf32> to vector<128xf32>
    %62 = vector.shape_cast %61 : vector<128xf32> to vector<1x128xf32>
    %63 = tpu.concatenate %59, %62 in 0 : vector<1x128xf32>, vector<1x128xf32> -> vector<2x128xf32>
    %c0_28 = arith.constant 0 : index
    %c0_29 = arith.constant 0 : index
    %c0_30 = arith.constant 0 : index
    %64 = vector.load %arg6[%c0_28, %c0_29, %c0_30] : memref<1x2x128xf32, #tpu.memory_space<vmem>>, vector<1x2x128xf32>
    %65 = vector.shape_cast %64 : vector<1x2x128xf32> to vector<2x128xf32>
    %66 = vector.shape_cast %63 : vector<2x128xf32> to vector<1x2x128xf32>
    tpu.vector_store %arg6[%c0_28, %c0_29, %c0_30], %66 {strides = array<i32>} : memref<1x2x128xf32, #tpu.memory_space<vmem>>, vector<1x2x128xf32>,
    return
  }
  func.func @transform_0(%arg0: i32) -> (i32, i32, i32) {
    %c0_i32 = arith.constant 0 : i32
    %c0_i32_0 = arith.constant 0 : i32
    %c0_i32_1 = arith.constant 0 : i32
    return %arg0, %c0_i32, %c0_i32_0 : i32, i32, i32
  }
  func.func @transform_1(%arg0: i32) -> (i32, i32, i32) {
    %c0_i32 = arith.constant 0 : i32
    %c0_i32_0 = arith.constant 0 : i32
    %c0_i32_1 = arith.constant 0 : i32
    %c0_i32_2 = arith.constant 0 : i32
    return %c0_i32, %c0_i32_0, %c0_i32_1 : i32, i32, i32
  }
  func.func @transform_2(%arg0: i32) -> (i32, i32) {
    %c0_i32 = arith.constant 0 : i32
    %c0_i32_0 = arith.constant 0 : i32
    %c0_i32_1 = arith.constant 0 : i32
    return %c0_i32, %c0_i32_0 : i32, i32
  }
  func.func @transform_3(%arg0: i32) -> (i32, i32) {
    %c0_i32 = arith.constant 0 : i32
    %c0_i32_0 = arith.constant 0 : i32
    %c0_i32_1 = arith.constant 0 : i32
    return %c0_i32, %c0_i32_0 : i32, i32
  }
  func.func @transform_4(%arg0: i32) -> (i32, i32, i32) {
    %c0_i32 = arith.constant 0 : i32
    %c0_i32_0 = arith.constant 0 : i32
    %c0_i32_1 = arith.constant 0 : i32
    return %arg0, %c0_i32, %c0_i32_0 : i32, i32, i32
  }
  func.func @transform_5(%arg0: i32) -> (i32, i32, i32) {
    %c0_i32 = arith.constant 0 : i32
    %c0_i32_0 = arith.constant 0 : i32
    %c0_i32_1 = arith.constant 0 : i32
    return %arg0, %c0_i32, %c0_i32_0 : i32, i32, i32
  }
}

</mosaic_0001>

<llo_original>
// kernel: model1_forward.2
$region0: #{model1_forward.2}
  #allocation0 [shape = 'u32[]', space=smem, size = 0x4, offset = 0x4, fixed_abs, tag = 'smem constant byte address 0x4 - core index']
  #allocation1 [shape = 'u32[144,128]{1,0:T(1,128)}', space=vmem, size = 0x12000, scoped, tag = 'internal scratch']
  %s0 = inlined_call_operand.vmem [shape: f32[1,32,64], index: 0, kind: input, shape index: {}]
  %s1 = inlined_call_operand.vmem [shape: bf16[3,64,128], index: 1, kind: input, shape index: {}]
  %s2 = inlined_call_operand.vmem [shape: bf16[1,32,128], index: 2, kind: output, shape index: {0}]
  %s3 = inlined_call_operand.vmem [shape: f32[1,2,128], index: 3, kind: output, shape index: {1}]
  %4 = xla_tuple %s2, %s3
  %s5 = sld [smem:[#allocation0]]
  $region26: #{model1_forward.2} parent=0
    _
  %s7 = ssub.s32 1, %s5
  %s8 = scalar_select 0, %s7, %s5
  // Predicated region
  $region2: #{model1_forward.2} parent=0 // pred_check
    _
  $region3: #{model1_forward.2} parent=0 // pred_check_branch
    %10 = sbr.rel (0) target = $region5
  $region4: #{model1_forward.2} parent=0 // pred_region
    _
  $region5: #{model1_forward.2} parent=0 // pred_fallthru
    _
  // Predicated region
  $region6: #{model1_forward.2} parent=0 // pred_check
    _
  $region7: #{model1_forward.2} parent=0 // pred_check_branch
    %12 = sbr.rel (0) target = $region9
  $region8: #{model1_forward.2} parent=0 // pred_region
    _
  $region9: #{model1_forward.2} parent=0 // pred_fallthru
    _
  %v14 = vld [vmem:[%s0] sm:$0xff]
  %v15 = vld [vmem:[%s0 + $0x8] sm:$0xff]
  %v16 = vld [vmem:[%s0 + $0x10] sm:$0xff]
  %v17 = vld [vmem:[%s0 + $0x18] sm:$0xff]
  %v18 = vlaneseq
  %v19 = vshrl.u32 %v18, 7
  %v20 = vadd.s32 %v19, 8
  %v21 = vadd.s32 %v19, 16
  %v22 = vadd.s32 %v19, 24
  %vm23 = vcmp.lt.s32.totalorder %v19, 0
  %v24 = vsub.s32 0, %v19
  %v25 = vsel %vm23, %v24, %v19
  %v26 = vshrl.u32 %v25, 4
  %v27 = vand.u32 %v25, 15
  %v28 = vsub.s32 0, %v27
  %v29 = vsel %vm23, %v28, %v27
  %vm30 = vcmp.lt.s32.totalorder %v20, 0
  %v31 = vsub.s32 0, %v20
  %v32 = vsel %vm30, %v31, %v20
  %v33 = vshrl.u32 %v32, 4
  %v34 = vand.u32 %v32, 15
  %v35 = vsub.s32 0, %v34
  %v36 = vsel %vm30, %v35, %v34
  %vm37 = vcmp.lt.s32.totalorder %v21, 0
  %v38 = vsub.s32 0, %v21
  %v39 = vsel %vm37, %v38, %v21
  %v40 = vshrl.u32 %v39, 4
  %v41 = vand.u32 %v39, 15
  %v42 = vsub.s32 0, %v41
  %v43 = vsel %vm37, %v42, %v41
  %vm44 = vcmp.lt.s32.totalorder %v22, 0
  %v45 = vsub.s32 0, %v22
  %v46 = vsel %vm44, %v45, %v22
  %v47 = vshrl.u32 %v46, 4
  %v48 = vand.u32 %v46, 15
  %v49 = vsub.s32 0, %v48
  %v50 = vsel %vm44, %v49, %v48
  %vm51 = vcmp.ne.s32.totalorder %v29, 0
  %vm52 = vcmp.ne.s32.totalorder %v36, 0
  %vm53 = vcmp.ne.s32.totalorder %v43, 0
  %vm54 = vcmp.ne.s32.totalorder %v50, 0
  %vm55 = vcmp.lt.s32.totalorder %v29, 0
  %vm56 = vcmp.lt.s32.totalorder %v36, 0
  %vm57 = vcmp.lt.s32.totalorder %v43, 0
  %vm58 = vcmp.lt.s32.totalorder %v50, 0
  %vm59 = vmand %vm55, %vm51
  %vm60 = vmand %vm56, %vm52
  %vm61 = vmand %vm57, %vm53
  %vm62 = vmand %vm58, %vm54
  %v63 = vadd.s32 %v29, 16
  %v64 = vadd.s32 %v36, 16
  %v65 = vadd.s32 %v43, 16
  %v66 = vadd.s32 %v50, 16
  %v67 = vsel %vm59, %v63, %v29
  %v68 = vsel %vm60, %v64, %v36
  %v69 = vsel %vm61, %v65, %v43
  %v70 = vsel %vm62, %v66, %v50
  %vm71 = vcmp.eq.s32.totalorder %v67, 0
  %vm72 = vcmp.eq.s32.totalorder %v68, 0
  %vm73 = vcmp.eq.s32.totalorder %v69, 0
  %vm74 = vcmp.eq.s32.totalorder %v70, 0
  %vm79 = vcmask 1040384
  %v80 = vrot.slane %v14, 7
  %v81 = vrot.slane %v15, 7
  %v82 = vsel %vm79, %v80, %v81
  %v83 = vrot.slane %v16, 7
  %v84 = vsel %vm79, %v81, %v83
  %v85 = vrot.slane %v17, 7
  %v86 = vsel %vm79, %v83, %v85
  %v91 = vsel %vm79, 0.0, %v80
  %v92 = vsel %vm71, 0.0, %v91
  %v93 = vsel %vm72, 0.0, %v82
  %v94 = vsel %vm73, 0.0, %v84
  %v95 = vsel %vm74, 0.0, %v86
  %vm96 = vcmp.eq.s32.totalorder %v67, 15
  %vm97 = vcmp.eq.s32.totalorder %v68, 15
  %vm98 = vcmp.eq.s32.totalorder %v69, 15
  %vm99 = vcmp.eq.s32.totalorder %v70, 15
  %vm100 = vcmask 1046528
  %v101 = vrot.slane %v14, 1
  %v102 = vrot.slane %v15, 1
  %v103 = vsel %vm100, %v101, %v102
  %v104 = vrot.slane %v16, 1
  %v105 = vsel %vm100, %v102, %v104
  %v106 = vrot.slane %v17, 1
  %v107 = vsel %vm100, %v104, %v106
  %v112 = vsel %vm100, %v106, 0.0
  %v113 = vsel %vm96, 0.0, %v103
  %v114 = vsel %vm97, 0.0, %v105
  %v115 = vsel %vm98, 0.0, %v107
  %v116 = vsel %vm99, 0.0, %v112
  %v117 = vpack.c.bf16 %v93, %v92
  %v118 = vpack.c.bf16 %v95, %v94
  %v119 = vld [vmem:[%s1] sm:$0xf]
  %v120 = vld [vmem:[%s1 + $0x4] sm:$0xf]
  %v121 = vld [vmem:[%s1 + $0x8] sm:$0xf]
  %v122 = vld [vmem:[%s1 + $0xc] sm:$0xf]
  %v123 = vld [vmem:[%s1 + $0x10] sm:$0xf]
  %v124 = vld [vmem:[%s1 + $0x14] sm:$0xf]
  %v125 = vld [vmem:[%s1 + $0x18] sm:$0xf]
  %v126 = vld [vmem:[%s1 + $0x1c] sm:$0xf]
  %v127 = vpack.c.bf16 %v15, %v14
  %v128 = vpack.c.bf16 %v17, %v16
  %s129 = scalar_lea.vmem %s1, 32
  %v130 = vld [vmem:[%s129] sm:$0xf]
  %v131 = vld [vmem:[%s129 + $0x4] sm:$0xf]
  %v132 = vld [vmem:[%s129 + $0x8] sm:$0xf]
  %v133 = vld [vmem:[%s129 + $0xc] sm:$0xf]
  %v134 = vld [vmem:[%s129 + $0x10] sm:$0xf]
  %v135 = vld [vmem:[%s129 + $0x14] sm:$0xf]
  %v136 = vld [vmem:[%s129 + $0x18] sm:$0xf]
  %v137 = vld [vmem:[%s129 + $0x1c] sm:$0xf]
  %v146 = vunpack.c.l.b16 %v130
  %v147 = vunpack.c.l.b16 %v131
  %v148 = vunpack.c.l.b16 %v132
  %v149 = vunpack.c.l.b16 %v133
  %v150 = vunpack.c.l.b16 %v134
  %v151 = vunpack.c.l.b16 %v135
  %v152 = vunpack.c.l.b16 %v136
  %v153 = vunpack.c.l.b16 %v137
  %v154 = vpack.c.b16 %v147, %v146
  %v155 = vpack.c.b16 %v149, %v148
  %v156 = vpack.c.b16 %v151, %v150
  %v157 = vpack.c.b16 %v153, %v152
  %vm162 = vcmask 523264
  %v164 = vsel %vm162, %v127, 0
  %v167 = vsel %vm162, %v128, 0
  %169 = vmatprep.subr.bf16.mxu0 0
  %170 = vmatpush1.bf16.msra.mxu0 %v154
  %171 = vmatprep.subr.bf16.mxu0 0
  %172 = vmatpush1.bf16.msra.mxu0 %v155
  %173 = vmatprep.subr.bf16.mxu0 0
  %174 = vmatpush1.bf16.msra.mxu0 %v156
  %175 = vmatprep.subr.bf16.mxu0 0
  %176 = vmatpush1.bf16.msra.mxu0 %v157
  %177 = vmatprep.subr.bf16.mxu0 0
  %178 = vmatpush1.bf16.msra.mxu0 0
  %179 = vmatprep.subr.bf16.mxu0 0
  %180 = vmatpush1.bf16.msra.mxu0 0
  %181 = vmatprep.subr.bf16.mxu0 0
  %182 = vmatpush1.bf16.msra.mxu0 0
  %183 = vmatprep.subr.bf16.mxu0 0
  %184 = vmatpush1.bf16.msra.mxu0 0
  %185 = vmatprep.subr.bf16.mxu0 0
  %186 = vmatpush1.bf16.msra.mxu0 0
  %187 = vmatprep.subr.bf16.mxu0 0
  %188 = vmatpush1.bf16.msra.mxu0 0
  %189 = vmatprep.subr.bf16.mxu0 0
  %190 = vmatpush1.bf16.msra.mxu0 0
  %191 = vmatprep.subr.bf16.mxu0 0
  %192 = vmatpush1.bf16.msra.mxu0 0
  %193 = vmatprep.subr.bf16.mxu0 0
  %194 = vmatpush1.bf16.msra.mxu0 0
  %195 = vmatprep.subr.bf16.mxu0 0
  %196 = vmatpush1.bf16.msra.mxu0 0
  %197 = vmatprep.subr.bf16.mxu0 0
  %198 = vmatpush1.bf16.msra.mxu0 0
  %199 = vmatprep.subr.bf16.mxu0 0
  %200 = vmatpush1.bf16.msra.mxu0 0
  %201 = vmatprep.mubr.bf16.mxu0 0
  %202 = vmatmul.mubr.bf16.gmra.mrb[0].mxu0 %v164
  %v203 = vpop.f32.mrb[0].mxu0
  %v204 = vadd.f32 0.0, %v203
  %v205 = vpop.f32.mrb[0].mxu0
  %v206 = vpop.f32.mrb[0].mxu0
  %v207 = vadd.f32 0.0, %v206
  %v208 = vpop.f32.mrb[0].mxu0
  %209 = vmatprep.mubr.bf16.mxu0 0
  %210 = vmatmul.mubr.bf16.gmra.mrb[0].mxu0 %v167
  %v211 = vpop.f32.mrb[0].mxu0
  %v212 = vadd.f32 0.0, %v211
  %v213 = vpop.f32.mrb[0].mxu0
  %v214 = vpop.f32.mrb[0].mxu0
  %v215 = vadd.f32 0.0, %v214
  %v216 = vpop.f32.mrb[0].mxu0
  %217 = vdwg.mxu0
  %v226 = vunpack.c.l.b16 %v119
  %v227 = vunpack.c.l.b16 %v120
  %v228 = vunpack.c.l.b16 %v121
  %v229 = vunpack.c.l.b16 %v122
  %v230 = vunpack.c.l.b16 %v123
  %v231 = vunpack.c.l.b16 %v124
  %v232 = vunpack.c.l.b16 %v125
  %v233 = vunpack.c.l.b16 %v126
  %v234 = vpack.c.b16 %v227, %v226
  %v235 = vpack.c.b16 %v229, %v228
  %v236 = vpack.c.b16 %v231, %v230
  %v237 = vpack.c.b16 %v233, %v232
  %v243 = vsel %vm162, %v117, 0
  %v246 = vsel %vm162, %v118, 0
  %248 = vmatprep.subr.bf16.mxu0 0
  %249 = vmatpush1.bf16.msra.mxu0 %v234
  %250 = vmatprep.subr.bf16.mxu0 0
  %251 = vmatpush1.bf16.msra.mxu0 %v235
  %252 = vmatprep.subr.bf16.mxu0 0
  %253 = vmatpush1.bf16.msra.mxu0 %v236
  %254 = vmatprep.subr.bf16.mxu0 0
  %255 = vmatpush1.bf16.msra.mxu0 %v237
  %256 = vmatprep.subr.bf16.mxu0 0
  %257 = vmatpush1.bf16.msra.mxu0 0
  %258 = vmatprep.subr.bf16.mxu0 0
  %259 = vmatpush1.bf16.msra.mxu0 0
  %260 = vmatprep.subr.bf16.mxu0 0
  %261 = vmatpush1.bf16.msra.mxu0 0
  %262 = vmatprep.subr.bf16.mxu0 0
  %263 = vmatpush1.bf16.msra.mxu0 0
  %264 = vmatprep.subr.bf16.mxu0 0
  %265 = vmatpush1.bf16.msra.mxu0 0
  %266 = vmatprep.subr.bf16.mxu0 0
  %267 = vmatpush1.bf16.msra.mxu0 0
  %268 = vmatprep.subr.bf16.mxu0 0
  %269 = vmatpush1.bf16.msra.mxu0 0
  %270 = vmatprep.subr.bf16.mxu0 0
  %271 = vmatpush1.bf16.msra.mxu0 0
  %272 = vmatprep.subr.bf16.mxu0 0
  %273 = vmatpush1.bf16.msra.mxu0 0
  %274 = vmatprep.subr.bf16.mxu0 0
  %275 = vmatpush1.bf16.msra.mxu0 0
  %276 = vmatprep.subr.bf16.mxu0 0
  %277 = vmatpush1.bf16.msra.mxu0 0
  %278 = vmatprep.subr.bf16.mxu0 0
  %279 = vmatpush1.bf16.msra.mxu0 0
  %280 = vmatprep.mubr.bf16.mxu0 0
  %281 = vmatmul.mubr.bf16.gmra.mrb[0].mxu0 %v243
  %v282 = vpop.f32.mrb[0].mxu0
  %v283 = vadd.f32 %v204, %v282
  %v284 = vpop.f32.mrb[0].mxu0
  %v285 = vpop.f32.mrb[0].mxu0
  %v286 = vadd.f32 %v207, %v285
  %v287 = vpop.f32.mrb[0].mxu0
  %288 = vmatprep.mubr.bf16.mxu0 0
  %289 = vmatmul.mubr.bf16.gmra.mrb[0].mxu0 %v246
  %v290 = vpop.f32.mrb[0].mxu0
  %v291 = vadd.f32 %v212, %v290
  %v292 = vpop.f32.mrb[0].mxu0
  %v293 = vpop.f32.mrb[0].mxu0
  %v294 = vadd.f32 %v215, %v293
  %v295 = vpop.f32.mrb[0].mxu0
  %296 = vdwg.mxu0
  %v297 = vpack.c.bf16 %v114, %v113
  %v298 = vpack.c.bf16 %v116, %v115
  %s299 = scalar_lea.vmem %s1, 64
  %v300 = vld [vmem:[%s299] sm:$0xf]
  %v301 = vld [vmem:[%s299 + $0x4] sm:$0xf]
  %v302 = vld [vmem:[%s299 + $0x8] sm:$0xf]
  %v303 = vld [vmem:[%s299 + $0xc] sm:$0xf]
  %v304 = vld [vmem:[%s299 + $0x10] sm:$0xf]
  %v305 = vld [vmem:[%s299 + $0x14] sm:$0xf]
  %v306 = vld [vmem:[%s299 + $0x18] sm:$0xf]
  %v307 = vld [vmem:[%s299 + $0x1c] sm:$0xf]
  %v316 = vunpack.c.l.b16 %v300
  %v317 = vunpack.c.l.b16 %v301
  %v318 = vunpack.c.l.b16 %v302
  %v319 = vunpack.c.l.b16 %v303
  %v320 = vunpack.c.l.b16 %v304
  %v321 = vunpack.c.l.b16 %v305
  %v322 = vunpack.c.l.b16 %v306
  %v323 = vunpack.c.l.b16 %v307
  %v324 = vpack.c.b16 %v317, %v316
  %v325 = vpack.c.b16 %v319, %v318
  %v326 = vpack.c.b16 %v321, %v320
  %v327 = vpack.c.b16 %v323, %v322
  %v333 = vsel %vm162, %v297, 0
  %v336 = vsel %vm162, %v298, 0
  %338 = vmatprep.subr.bf16.mxu0 0
  %339 = vmatpush1.bf16.msra.mxu0 %v324
  %340 = vmatprep.subr.bf16.mxu0 0
  %341 = vmatpush1.bf16.msra.mxu0 %v325
  %342 = vmatprep.subr.bf16.mxu0 0
  %343 = vmatpush1.bf16.msra.mxu0 %v326
  %344 = vmatprep.subr.bf16.mxu0 0
  %345 = vmatpush1.bf16.msra.mxu0 %v327
  %346 = vmatprep.subr.bf16.mxu0 0
  %347 = vmatpush1.bf16.msra.mxu0 0
  %348 = vmatprep.subr.bf16.mxu0 0
  %349 = vmatpush1.bf16.msra.mxu0 0
  %350 = vmatprep.subr.bf16.mxu0 0
  %351 = vmatpush1.bf16.msra.mxu0 0
  %352 = vmatprep.subr.bf16.mxu0 0
  %353 = vmatpush1.bf16.msra.mxu0 0
  %354 = vmatprep.subr.bf16.mxu0 0
  %355 = vmatpush1.bf16.msra.mxu0 0
  %356 = vmatprep.subr.bf16.mxu0 0
  %357 = vmatpush1.bf16.msra.mxu0 0
  %358 = vmatprep.subr.bf16.mxu0 0
  %359 = vmatpush1.bf16.msra.mxu0 0
  %360 = vmatprep.subr.bf16.mxu0 0
  %361 = vmatpush1.bf16.msra.mxu0 0
  %362 = vmatprep.subr.bf16.mxu0 0
  %363 = vmatpush1.bf16.msra.mxu0 0
  %364 = vmatprep.subr.bf16.mxu0 0
  %365 = vmatpush1.bf16.msra.mxu0 0
  %366 = vmatprep.subr.bf16.mxu0 0
  %367 = vmatpush1.bf16.msra.mxu0 0
  %368 = vmatprep.subr.bf16.mxu0 0
  %369 = vmatpush1.bf16.msra.mxu0 0
  %370 = vmatprep.mubr.bf16.mxu0 0
  %371 = vmatmul.mubr.bf16.gmra.mrb[0].mxu0 %v333
  %v372 = vpop.f32.mrb[0].mxu0
  %v373 = vadd.f32 0.0, %v372
  %v374 = vpop.f32.mrb[0].mxu0
  %v375 = vpop.f32.mrb[0].mxu0
  %v376 = vadd.f32 0.0, %v375
  %v377 = vpop.f32.mrb[0].mxu0
  %378 = vmatprep.mubr.bf16.mxu0 0
  %379 = vmatmul.mubr.bf16.gmra.mrb[0].mxu0 %v336
  %v380 = vpop.f32.mrb[0].mxu0
  %v381 = vadd.f32 0.0, %v380
  %v382 = vpop.f32.mrb[0].mxu0
  %v383 = vpop.f32.mrb[0].mxu0
  %v384 = vadd.f32 0.0, %v383
  %v385 = vpop.f32.mrb[0].mxu0
  %386 = vdwg.mxu0
  %v387 = vadd.f32 %v283, %v373
  %v388 = vadd.f32 %v286, %v376
  %v389 = vadd.f32 %v291, %v381
  %v390 = vadd.f32 %v294, %v384
  %v391 = vpack.c.bf16 %v388, %v387
  %v392 = vpack.c.bf16 %v390, %v389
  %v395 = vunpack.c.l.b16 %v391
  %v396 = vunpack.c.h.b16 %v391
  %v397 = vunpack.c.l.b16 %v392
  %v398 = vunpack.c.h.b16 %v392
  %v399 = vpack.c.b16 %v395, %v395
  %v400 = vpack.c.b16 %v396, %v396
  %v401 = vpack.c.b16 %v397, %v397
  %v402 = vpack.c.b16 %v398, %v398
  %407 = vst [vmem:[%s2] sm:$0xf] %v399
  %408 = vst [vmem:[%s2 + $0x4] sm:$0xf] %v400
  %409 = vst [vmem:[%s2 + $0x8] sm:$0xf] %v401
  %410 = vst [vmem:[%s2 + $0xc] sm:$0xf] %v402
  %v411 = vadd.f32 %v387, %v388
  %v412 = vadd.f32 %v411, %v389
  %v413 = vadd.f32 %v412, %v390
  %v414 = vrot.slane %v413, 4
  %v415 = vadd.f32 %v413, %v414
  %v416 = vrot.slane %v415, 2
  %v417 = vadd.f32 %v415, %v416
  %v418 = vrot.slane %v417, 1
  %v419 = vadd.f32 %v417, %v418
  %v420 = vmul.f32 %v387, %v387
  %v421 = vmul.f32 %v388, %v388
  %v422 = vmul.f32 %v389, %v389
  %v423 = vmul.f32 %v390, %v390
  %v424 = vadd.f32 %v420, %v421
  %v425 = vadd.f32 %v424, %v422
  %v426 = vadd.f32 %v425, %v423
  %v427 = vrot.slane %v426, 4
  %v428 = vadd.f32 %v426, %v427
  %v429 = vrot.slane %v428, 2
  %v430 = vadd.f32 %v428, %v429
  %v431 = vrot.slane %v430, 1
  %v432 = vadd.f32 %v430, %v431
  %v433 = vsel %vm79, %v419, %v432
  %434 = vst [vmem:[%s3] sm:$0x3] %v433
  // Predicated region
  $region10: #{model1_forward.2} parent=0 // pred_check
    _
  $region11: #{model1_forward.2} parent=0 // pred_check_branch
    %436 = sbr.rel (0) target = $region13
  $region12: #{model1_forward.2} parent=0 // pred_region
    _
  $region13: #{model1_forward.2} parent=0 // pred_fallthru
    _
  // Predicated region
  $region14: #{model1_forward.2} parent=0 // pred_check
    _
  $region15: #{model1_forward.2} parent=0 // pred_check_branch
    %438 = sbr.rel (0) target = $region17
  $region16: #{model1_forward.2} parent=0 // pred_region
    _
  $region17: #{model1_forward.2} parent=0 // pred_fallthru
    _
  // Predicated region
  $region18: #{model1_forward.2} parent=0 // pred_check
    _
  $region19: #{model1_forward.2} parent=0 // pred_check_branch
    %440 = sbr.rel (0) target = $region21
  $region20: #{model1_forward.2} parent=0 // pred_region
    _
  $region21: #{model1_forward.2} parent=0 // pred_fallthru
    _
  // Predicated region
  $region22: #{model1_forward.2} parent=0 // pred_check
    _
  $region23: #{model1_forward.2} parent=0 // pred_check_branch
    %442 = sbr.rel (0) target = $region25
  $region24: #{model1_forward.2} parent=0 // pred_region
    _
  $region25: #{model1_forward.2} parent=0 // pred_fallthru
    _

// kernel: tile.28
$region0: #{tile.28}
  #allocation0 [shape = 's32[1]{0}', space=sflag, size = 0x4, scoped, tag = 'scoped memory for tile.28']
  %s0 = inlined_call_operand.vmem [shape: f32[8], index: 0, kind: input, shape index: {}]
  %s1 = inlined_call_operand.vmem [shape: f32[16,8], index: 1, kind: output, shape index: {}]
  // Predicated region
  $region2: #{tile.28} parent=0 // pred_check
    _
  $region3: #{tile.28} parent=0 // pred_check_branch
    %3 = sbr.rel (0) target = $region5
  $region4: #{tile.28} parent=0 // pred_region
    _
  $region5: #{tile.28} parent=0 // pred_fallthru
    _
  %v4 = vld [vmem:[%s0] ss:$0 sm:$0xff]
  %5 = vst [vmem:[%s1] sm:$0xff] %v4
  %s6 = scalar_lea.vmem %s1, 8
  %7 = vst [vmem:[%s6] sm:$0xff] %v4

// kernel: tile.29
$region0: #{tile.29}
  %s0 = inlined_call_operand.vmem [shape: f32[16,8], index: 0, kind: input, shape index: {}]
  %s1 = inlined_call_operand.vmem [shape: f32[1,128], index: 1, kind: output, shape index: {}]
  $region1: #{tile.29} parent=0
    #allocation0 [shape = 'u8[4096]{0}', space=vmem, size = 0x1000, scoped, tag = 'scoped mem for output reshape']
    %v2 = vld [vmem:[%s0] sm:$0x1]
    %vm3 = vcmask 64512
    %4 = vst.msk [vmem:[#allocation0] sm:$0x1] %vm3, %v2
    %s5 = scalar_lea.vmem %s0, 15
    %v6 = vld [vmem:[%s5] sm:$0x1]
    %7 = vrot.lane.b32.xlu0 %v6, 120
    %v8 = vpop.permute.xlu0 %7
    %vm9 = vcmask 1048512
    %10 = vst.msk [vmem:[#allocation0] sm:$0x1] %vm9, %v8
    %s11 = scalar_lea.vmem %s0, 14
    %v12 = vld [vmem:[%s11] sm:$0x1]
    %13 = vrot.lane.b32.xlu0 %v12, 112
    %v14 = vpop.permute.xlu0 %13
    %vm15 = vcmask 982912
    %16 = vst.msk [vmem:[#allocation0] sm:$0x1] %vm15, %v14
    %s17 = scalar_lea.vmem %s0, 13
    %v18 = vld [vmem:[%s17] sm:$0x1]
    %19 = vrot.lane.b32.xlu0 %v18, 104
    %v20 = vpop.permute.xlu0 %19
    %vm21 = vcmask 917312
    %22 = vst.msk [vmem:[#allocation0] sm:$0x1] %vm21, %v20
    %s23 = scalar_lea.vmem %s0, 12
    %v24 = vld [vmem:[%s23] sm:$0x1]
    %25 = vrot.lane.b32.xlu0 %v24, 96
    %v26 = vpop.permute.xlu0 %25
    %vm27 = vcmask 851712
    %28 = vst.msk [vmem:[#allocation0] sm:$0x1] %vm27, %v26
    %s29 = scalar_lea.vmem %s0, 11
    %v30 = vld [vmem:[%s29] sm:$0x1]
    %31 = vrot.lane.b32.xlu0 %v30, 88
    %v32 = vpop.permute.xlu0 %31
    %vm33 = vcmask 786112
    %34 = vst.msk [vmem:[#allocation0] sm:$0x1] %vm33, %v32
    %s35 = scalar_lea.vmem %s0, 10
    %v36 = vld [vmem:[%s35] sm:$0x1]
    %37 = vrot.lane.b32.xlu0 %v36, 80
    %v38 = vpop.permute.xlu0 %37
    %vm39 = vcmask 720512
    %40 = vst.msk [vmem:[#allocation0] sm:$0x1] %vm39, %v38
    %s41 = scalar_lea.vmem %s0, 9
    %v42 = vld [vmem:[%s41] sm:$0x1]
    %43 = vrot.lane.b32.xlu0 %v42, 72
    %v44 = vpop.permute.xlu0 %43
    %vm45 = vcmask 654912
    %46 = vst.msk [vmem:[#allocation0] sm:$0x1] %vm45, %v44
    %s47 = scalar_lea.vmem %s0, 8
    %v48 = vld [vmem:[%s47] sm:$0x1]
    %49 = vrot.lane.b32.xlu0 %v48, 64
    %v50 = vpop.permute.xlu0 %49
    %vm51 = vcmask 589312
    %52 = vst.msk [vmem:[#allocation0] sm:$0x1] %vm51, %v50
    %s53 = scalar_lea.vmem %s0, 7
    %v54 = vld [vmem:[%s53] sm:$0x1]
    %55 = vrot.lane.b32.xlu0 %v54, 56
    %v56 = vpop.permute.xlu0 %55
    %vm57 = vcmask 523712
    %58 = vst.msk [vmem:[#allocation0] sm:$0x1] %vm57, %v56
    %s59 = scalar_lea.vmem %s0, 6
    %v60 = vld [vmem:[%s59] sm:$0x1]
    %61 = vrot.lane.b32.xlu0 %v60, 48
    %v62 = vpop.permute.xlu0 %61
    %vm63 = vcmask 458112
    %64 = vst.msk [vmem:[#allocation0] sm:$0x1] %vm63, %v62
    %s65 = scalar_lea.vmem %s0, 5
    %v66 = vld [vmem:[%s65] sm:$0x1]
    %67 = vrot.lane.b32.xlu0 %v66, 40
    %v68 = vpop.permute.xlu0 %67
    %vm69 = vcmask 392512
    %70 = vst.msk [vmem:[#allocation0] sm:$0x1] %vm69, %v68
    %s71 = scalar_lea.vmem %s0, 4
    %v72 = vld [vmem:[%s71] sm:$0x1]
    %73 = vrot.lane.b32.xlu0 %v72, 32
    %v74 = vpop.permute.xlu0 %73
    %vm75 = vcmask 326912
    %76 = vst.msk [vmem:[#allocation0] sm:$0x1] %vm75, %v74
    %s77 = scalar_lea.vmem %s0, 3
    %v78 = vld [vmem:[%s77] sm:$0x1]
    %79 = vrot.lane.b32.xlu0 %v78, 24
    %v80 = vpop.permute.xlu0 %79
    %vm81 = vcmask 261312
    %82 = vst.msk [vmem:[#allocation0] sm:$0x1] %vm81, %v80
    %s83 = scalar_lea.vmem %s0, 2
    %v84 = vld [vmem:[%s83] sm:$0x1]
    %85 = vrot.lane.b32.xlu0 %v84, 16
    %v86 = vpop.permute.xlu0 %85
    %vm87 = vcmask 195712
    %88 = vst.msk [vmem:[#allocation0] sm:$0x1] %vm87, %v86
    %s89 = scalar_lea.vmem %s0, 1
    %v90 = vld [vmem:[%s89] sm:$0x1]
    %91 = vrot.lane.b32.xlu0 %v90, 8
    %v92 = vpop.permute.xlu0 %91
    %vm93 = vcmask 130112
    %94 = vst.msk [vmem:[#allocation0] sm:$0x1] %vm93, %v92
    %s96 = sshllo.u32 0, 1
    %v98 = vld [vmem:[#allocation0] sm:%s96]
    %s99 = sshllo.u32 0, 1
    %100 = vst [vmem:[%s1] sm:%s99] %v98

// kernel: model1_forward.3
$region0: #{model1_forward.3}
  #allocation0 [shape = 'u32[]', space=smem, size = 0x4, offset = 0x4, fixed_abs, tag = 'smem constant byte address 0x4 - core index']
  #allocation1 [shape = 'u32[144,128]{1,0:T(1,128)}', space=vmem, size = 0x12000, scoped, tag = 'internal scratch']
  %s0 = inlined_call_operand.vmem [shape: bf16[1,32,128], index: 0, kind: input, shape index: {}]
  %s1 = inlined_call_operand.vmem [shape: bf16[3,128,128], index: 1, kind: input, shape index: {}]
  %s2 = inlined_call_operand.vmem [shape: f32[1,128], index: 2, kind: input, shape index: {}]
  %s3 = inlined_call_operand.vmem [shape: f32[1,128], index: 3, kind: input, shape index: {}]
  %s4 = inlined_call_operand.vmem [shape: f32[1,32,128], index: 4, kind: output, shape index: {0}]
  %s5 = inlined_call_operand.vmem [shape: f32[1,2,128], index: 5, kind: output, shape index: {1}]
  %6 = xla_tuple %s4, %s5
  %s7 = sld [smem:[#allocation0]]
  $region34: #{model1_forward.3} parent=0
    _
  %s9 = ssub.s32 1, %s7
  %s10 = scalar_select 0, %s9, %s7
  // Predicated region
  $region2: #{model1_forward.3} parent=0 // pred_check
    _
  $region3: #{model1_forward.3} parent=0 // pred_check_branch
    %12 = sbr.rel (0) target = $region5
  $region4: #{model1_forward.3} parent=0 // pred_region
    _
  $region5: #{model1_forward.3} parent=0 // pred_fallthru
    _
  // Predicated region
  $region6: #{model1_forward.3} parent=0 // pred_check
    _
  $region7: #{model1_forward.3} parent=0 // pred_check_branch
    %14 = sbr.rel (0) target = $region9
  $region8: #{model1_forward.3} parent=0 // pred_region
    _
  $region9: #{model1_forward.3} parent=0 // pred_fallthru
    _
  // Predicated region
  $region10: #{model1_forward.3} parent=0 // pred_check
    _
  $region11: #{model1_forward.3} parent=0 // pred_check_branch
    %16 = sbr.rel (0) target = $region13
  $region12: #{model1_forward.3} parent=0 // pred_region
    _
  $region13: #{model1_forward.3} parent=0 // pred_fallthru
    _
  // Predicated region
  $region14: #{model1_forward.3} parent=0 // pred_check
    _
  $region15: #{model1_forward.3} parent=0 // pred_check_branch
    %18 = sbr.rel (0) target = $region17
  $region16: #{model1_forward.3} parent=0 // pred_region
    _
  $region17: #{model1_forward.3} parent=0 // pred_fallthru
    _
  %v20 = vld [vmem:[%s0] sm:$0xf]
  %v21 = vld [vmem:[%s0 + $0x4] sm:$0xf]
  %v22 = vld [vmem:[%s0 + $0x8] sm:$0xf]
  %v23 = vld [vmem:[%s0 + $0xc] sm:$0xf]
  %v24 = vunpack.c.l.bf16 %v20
  %v25 = vunpack.c.l.bf16 %v21
  %v26 = vunpack.c.l.bf16 %v22
  %v27 = vunpack.c.l.bf16 %v23
  %v28 = vld [vmem:[%s2] sm:$0x1]
  %v30 = vlaneseq
  %v31 = vshrl.u32 %v30, 7
  %v32 = vsub.s32 0, %v31
  %v33 = vrot.slane %v28, %v32
  %v35 = vmul.f32 %v24, %v33
  %v36 = vmul.f32 %v25, %v33
  %v37 = vmul.f32 %v26, %v33
  %v38 = vmul.f32 %v27, %v33
  %v39 = vld [vmem:[%s3] sm:$0x1]
  %v41 = vlaneseq
  %v42 = vshrl.u32 %v41, 7
  %v43 = vsub.s32 0, %v42
  %v44 = vrot.slane %v39, %v43
  %v46 = vadd.f32 %v35, %v44
  %v47 = vadd.f32 %v36, %v44
  %v48 = vadd.f32 %v37, %v44
  %v49 = vadd.f32 %v38, %v44
  %v50 = vmax.f32 %v46, 0.0
  %v51 = vmax.f32 %v47, 0.0
  %v52 = vmax.f32 %v48, 0.0
  %v53 = vmax.f32 %v49, 0.0
  %v54 = vlaneseq
  %v55 = vshrl.u32 %v54, 7
  %v56 = vadd.s32 %v55, 8
  %v57 = vadd.s32 %v55, 16
  %v58 = vadd.s32 %v55, 24
  %vm59 = vcmp.lt.s32.totalorder %v55, 0
  %v60 = vsub.s32 0, %v55
  %v61 = vsel %vm59, %v60, %v55
  %v62 = vshrl.u32 %v61, 4
  %v63 = vand.u32 %v61, 15
  %v64 = vsub.s32 0, %v63
  %v65 = vsel %vm59, %v64, %v63
  %vm66 = vcmp.lt.s32.totalorder %v56, 0
  %v67 = vsub.s32 0, %v56
  %v68 = vsel %vm66, %v67, %v56
  %v69 = vshrl.u32 %v68, 4
  %v70 = vand.u32 %v68, 15
  %v71 = vsub.s32 0, %v70
  %v72 = vsel %vm66, %v71, %v70
  %vm73 = vcmp.lt.s32.totalorder %v57, 0
  %v74 = vsub.s32 0, %v57
  %v75 = vsel %vm73, %v74, %v57
  %v76 = vshrl.u32 %v75, 4
  %v77 = vand.u32 %v75, 15
  %v78 = vsub.s32 0, %v77
  %v79 = vsel %vm73, %v78, %v77
  %vm80 = vcmp.lt.s32.totalorder %v58, 0
  %v81 = vsub.s32 0, %v58
  %v82 = vsel %vm80, %v81, %v58
  %v83 = vshrl.u32 %v82, 4
  %v84 = vand.u32 %v82, 15
  %v85 = vsub.s32 0, %v84
  %v86 = vsel %vm80, %v85, %v84
  %vm87 = vcmp.ne.s32.totalorder %v65, 0
  %vm88 = vcmp.ne.s32.totalorder %v72, 0
  %vm89 = vcmp.ne.s32.totalorder %v79, 0
  %vm90 = vcmp.ne.s32.totalorder %v86, 0
  %vm91 = vcmp.lt.s32.totalorder %v65, 0
  %vm92 = vcmp.lt.s32.totalorder %v72, 0
  %vm93 = vcmp.lt.s32.totalorder %v79, 0
  %vm94 = vcmp.lt.s32.totalorder %v86, 0
  %vm95 = vmand %vm91, %vm87
  %vm96 = vmand %vm92, %vm88
  %vm97 = vmand %vm93, %vm89
  %vm98 = vmand %vm94, %vm90
  %v99 = vadd.s32 %v65, 16
  %v100 = vadd.s32 %v72, 16
  %v101 = vadd.s32 %v79, 16
  %v102 = vadd.s32 %v86, 16
  %v103 = vsel %vm95, %v99, %v65
  %v104 = vsel %vm96, %v100, %v72
  %v105 = vsel %vm97, %v101, %v79
  %v106 = vsel %vm98, %v102, %v86
  %vm107 = vcmp.eq.s32.totalorder %v103, 0
  %vm108 = vcmp.eq.s32.totalorder %v104, 0
  %vm109 = vcmp.eq.s32.totalorder %v105, 0
  %vm110 = vcmp.eq.s32.totalorder %v106, 0
  %vm115 = vcmask 1040384
  %v116 = vrot.slane %v50, 7
  %v117 = vrot.slane %v51, 7
  %v118 = vsel %vm115, %v116, %v117
  %v119 = vrot.slane %v52, 7
  %v120 = vsel %vm115, %v117, %v119
  %v121 = vrot.slane %v53, 7
  %v122 = vsel %vm115, %v119, %v121
  %v127 = vsel %vm115, 0.0, %v116
  %v128 = vsel %vm107, 0.0, %v127
  %v129 = vsel %vm108, 0.0, %v118
  %v130 = vsel %vm109, 0.0, %v120
  %v131 = vsel %vm110, 0.0, %v122
  %vm132 = vcmp.eq.s32.totalorder %v103, 15
  %vm133 = vcmp.eq.s32.totalorder %v104, 15
  %vm134 = vcmp.eq.s32.totalorder %v105, 15
  %vm135 = vcmp.eq.s32.totalorder %v106, 15
  %vm136 = vcmask 1046528
  %v137 = vrot.slane %v50, 1
  %v138 = vrot.slane %v51, 1
  %v139 = vsel %vm136, %v137, %v138
  %v140 = vrot.slane %v52, 1
  %v141 = vsel %vm136, %v138, %v140
  %v142 = vrot.slane %v53, 1
  %v143 = vsel %vm136, %v140, %v142
  %v148 = vsel %vm136, %v142, 0.0
  %v149 = vsel %vm132, 0.0, %v139
  %v150 = vsel %vm133, 0.0, %v141
  %v151 = vsel %vm134, 0.0, %v143
  %v152 = vsel %vm135, 0.0, %v148
  %v153 = vpack.c.bf16 %v129, %v128
  %v154 = vpack.c.bf16 %v131, %v130
  %v155 = vld [vmem:[%s1] sm:$0xf]
  %v156 = vld [vmem:[%s1 + $0x4] sm:$0xf]
  %v157 = vld [vmem:[%s1 + $0x8] sm:$0xf]
  %v158 = vld [vmem:[%s1 + $0xc] sm:$0xf]
  %v159 = vld [vmem:[%s1 + $0x10] sm:$0xf]
  %v160 = vld [vmem:[%s1 + $0x14] sm:$0xf]
  %v161 = vld [vmem:[%s1 + $0x18] sm:$0xf]
  %v162 = vld [vmem:[%s1 + $0x1c] sm:$0xf]
  %v163 = vld [vmem:[%s1 + $0x20] sm:$0xf]
  %v164 = vld [vmem:[%s1 + $0x24] sm:$0xf]
  %v165 = vld [vmem:[%s1 + $0x28] sm:$0xf]
  %v166 = vld [vmem:[%s1 + $0x2c] sm:$0xf]
  %v167 = vld [vmem:[%s1 + $0x30] sm:$0xf]
  %v168 = vld [vmem:[%s1 + $0x34] sm:$0xf]
  %v169 = vld [vmem:[%s1 + $0x38] sm:$0xf]
  %v170 = vld [vmem:[%s1 + $0x3c] sm:$0xf]
  %v171 = vpack.c.bf16 %v51, %v50
  %v172 = vpack.c.bf16 %v53, %v52
  %s173 = scalar_lea.vmem %s1, 64
  %v174 = vld [vmem:[%s173] sm:$0xf]
  %v175 = vld [vmem:[%s173 + $0x4] sm:$0xf]
  %v176 = vld [vmem:[%s173 + $0x8] sm:$0xf]
  %v177 = vld [vmem:[%s173 + $0xc] sm:$0xf]
  %v178 = vld [vmem:[%s173 + $0x10] sm:$0xf]
  %v179 = vld [vmem:[%s173 + $0x14] sm:$0xf]
  %v180 = vld [vmem:[%s173 + $0x18] sm:$0xf]
  %v181 = vld [vmem:[%s173 + $0x1c] sm:$0xf]
  %v182 = vld [vmem:[%s173 + $0x20] sm:$0xf]
  %v183 = vld [vmem:[%s173 + $0x24] sm:$0xf]
  %v184 = vld [vmem:[%s173 + $0x28] sm:$0xf]
  %v185 = vld [vmem:[%s173 + $0x2c] sm:$0xf]
  %v186 = vld [vmem:[%s173 + $0x30] sm:$0xf]
  %v187 = vld [vmem:[%s173 + $0x34] sm:$0xf]
  %v188 = vld [vmem:[%s173 + $0x38] sm:$0xf]
  %v189 = vld [vmem:[%s173 + $0x3c] sm:$0xf]
  %v206 = vunpack.c.l.b16 %v174
  %v207 = vunpack.c.l.b16 %v175
  %v208 = vunpack.c.l.b16 %v176
  %v209 = vunpack.c.l.b16 %v177
  %v210 = vunpack.c.l.b16 %v178
  %v211 = vunpack.c.l.b16 %v179
  %v212 = vunpack.c.l.b16 %v180
  %v213 = vunpack.c.l.b16 %v181
  %v214 = vunpack.c.l.b16 %v182
  %v215 = vunpack.c.l.b16 %v183
  %v216 = vunpack.c.l.b16 %v184
  %v217 = vunpack.c.l.b16 %v185
  %v218 = vunpack.c.l.b16 %v186
  %v219 = vunpack.c.l.b16 %v187
  %v220 = vunpack.c.l.b16 %v188
  %v221 = vunpack.c.l.b16 %v189
  %v222 = vpack.c.b16 %v207, %v206
  %v223 = vpack.c.b16 %v209, %v208
  %v224 = vpack.c.b16 %v211, %v210
  %v225 = vpack.c.b16 %v213, %v212
  %v226 = vpack.c.b16 %v215, %v214
  %v227 = vpack.c.b16 %v217, %v216
  %v228 = vpack.c.b16 %v219, %v218
  %v229 = vpack.c.b16 %v221, %v220
  %238 = vmatprep.subr.bf16.mxu0 0
  %239 = vmatpush1.bf16.msra.mxu0 %v222
  %240 = vmatprep.subr.bf16.mxu0 0
  %241 = vmatpush1.bf16.msra.mxu0 %v223
  %242 = vmatprep.subr.bf16.mxu0 0
  %243 = vmatpush1.bf16.msra.mxu0 %v224
  %244 = vmatprep.subr.bf16.mxu0 0
  %245 = vmatpush1.bf16.msra.mxu0 %v225
  %246 = vmatprep.subr.bf16.mxu0 0
  %247 = vmatpush1.bf16.msra.mxu0 %v226
  %248 = vmatprep.subr.bf16.mxu0 0
  %249 = vmatpush1.bf16.msra.mxu0 %v227
  %250 = vmatprep.subr.bf16.mxu0 0
  %251 = vmatpush1.bf16.msra.mxu0 %v228
  %252 = vmatprep.subr.bf16.mxu0 0
  %253 = vmatpush1.bf16.msra.mxu0 %v229
  %254 = vmatprep.subr.bf16.mxu0 0
  %255 = vmatpush1.bf16.msra.mxu0 0
  %256 = vmatprep.subr.bf16.mxu0 0
  %257 = vmatpush1.bf16.msra.mxu0 0
  %258 = vmatprep.subr.bf16.mxu0 0
  %259 = vmatpush1.bf16.msra.mxu0 0
  %260 = vmatprep.subr.bf16.mxu0 0
  %261 = vmatpush1.bf16.msra.mxu0 0
  %262 = vmatprep.subr.bf16.mxu0 0
  %263 = vmatpush1.bf16.msra.mxu0 0
  %264 = vmatprep.subr.bf16.mxu0 0
  %265 = vmatpush1.bf16.msra.mxu0 0
  %266 = vmatprep.subr.bf16.mxu0 0
  %267 = vmatpush1.bf16.msra.mxu0 0
  %268 = vmatprep.subr.bf16.mxu0 0
  %269 = vmatpush1.bf16.msra.mxu0 0
  %270 = vmatprep.mubr.bf16.mxu0 0
  %271 = vmatmul.mubr.bf16.gmra.mrb[0].mxu0 %v171
  %v272 = vpop.f32.mrb[0].mxu0
  %v273 = vadd.f32 0.0, %v272
  %v274 = vpop.f32.mrb[0].mxu0
  %v275 = vpop.f32.mrb[0].mxu0
  %v276 = vadd.f32 0.0, %v275
  %v277 = vpop.f32.mrb[0].mxu0
  %278 = vmatprep.mubr.bf16.mxu0 0
  %279 = vmatmul.mubr.bf16.gmra.mrb[0].mxu0 %v172
  %v280 = vpop.f32.mrb[0].mxu0
  %v281 = vadd.f32 0.0, %v280
  %v282 = vpop.f32.mrb[0].mxu0
  %v283 = vpop.f32.mrb[0].mxu0
  %v284 = vadd.f32 0.0, %v283
  %v285 = vpop.f32.mrb[0].mxu0
  %286 = vdwg.mxu0
  %v303 = vunpack.c.l.b16 %v155
  %v304 = vunpack.c.l.b16 %v156
  %v305 = vunpack.c.l.b16 %v157
  %v306 = vunpack.c.l.b16 %v158
  %v307 = vunpack.c.l.b16 %v159
  %v308 = vunpack.c.l.b16 %v160
  %v309 = vunpack.c.l.b16 %v161
  %v310 = vunpack.c.l.b16 %v162
  %v311 = vunpack.c.l.b16 %v163
  %v312 = vunpack.c.l.b16 %v164
  %v313 = vunpack.c.l.b16 %v165
  %v314 = vunpack.c.l.b16 %v166
  %v315 = vunpack.c.l.b16 %v167
  %v316 = vunpack.c.l.b16 %v168
  %v317 = vunpack.c.l.b16 %v169
  %v318 = vunpack.c.l.b16 %v170
  %v319 = vpack.c.b16 %v304, %v303
  %v320 = vpack.c.b16 %v306, %v305
  %v321 = vpack.c.b16 %v308, %v307
  %v322 = vpack.c.b16 %v310, %v309
  %v323 = vpack.c.b16 %v312, %v311
  %v324 = vpack.c.b16 %v314, %v313
  %v325 = vpack.c.b16 %v316, %v315
  %v326 = vpack.c.b16 %v318, %v317
  %335 = vmatprep.subr.bf16.mxu0 0
  %336 = vmatpush1.bf16.msra.mxu0 %v319
  %337 = vmatprep.subr.bf16.mxu0 0
  %338 = vmatpush1.bf16.msra.mxu0 %v320
  %339 = vmatprep.subr.bf16.mxu0 0
  %340 = vmatpush1.bf16.msra.mxu0 %v321
  %341 = vmatprep.subr.bf16.mxu0 0
  %342 = vmatpush1.bf16.msra.mxu0 %v322
  %343 = vmatprep.subr.bf16.mxu0 0
  %344 = vmatpush1.bf16.msra.mxu0 %v323
  %345 = vmatprep.subr.bf16.mxu0 0
  %346 = vmatpush1.bf16.msra.mxu0 %v324
  %347 = vmatprep.subr.bf16.mxu0 0
  %348 = vmatpush1.bf16.msra.mxu0 %v325
  %349 = vmatprep.subr.bf16.mxu0 0
  %350 = vmatpush1.bf16.msra.mxu0 %v326
  %351 = vmatprep.subr.bf16.mxu0 0
  %352 = vmatpush1.bf16.msra.mxu0 0
  %353 = vmatprep.subr.bf16.mxu0 0
  %354 = vmatpush1.bf16.msra.mxu0 0
  %355 = vmatprep.subr.bf16.mxu0 0
  %356 = vmatpush1.bf16.msra.mxu0 0
  %357 = vmatprep.subr.bf16.mxu0 0
  %358 = vmatpush1.bf16.msra.mxu0 0
  %359 = vmatprep.subr.bf16.mxu0 0
  %360 = vmatpush1.bf16.msra.mxu0 0
  %361 = vmatprep.subr.bf16.mxu0 0
  %362 = vmatpush1.bf16.msra.mxu0 0
  %363 = vmatprep.subr.bf16.mxu0 0
  %364 = vmatpush1.bf16.msra.mxu0 0
  %365 = vmatprep.subr.bf16.mxu0 0
  %366 = vmatpush1.bf16.msra.mxu0 0
  %367 = vmatprep.mubr.bf16.mxu0 0
  %368 = vmatmul.mubr.bf16.gmra.mrb[0].mxu0 %v153
  %v369 = vpop.f32.mrb[0].mxu0
  %v370 = vadd.f32 %v273, %v369
  %v371 = vpop.f32.mrb[0].mxu0
  %v372 = vpop.f32.mrb[0].mxu0
  %v373 = vadd.f32 %v276, %v372
  %v374 = vpop.f32.mrb[0].mxu0
  %375 = vmatprep.mubr.bf16.mxu0 0
  %376 = vmatmul.mubr.bf16.gmra.mrb[0].mxu0 %v154
  %v377 = vpop.f32.mrb[0].mxu0
  %v378 = vadd.f32 %v281, %v377
  %v379 = vpop.f32.mrb[0].mxu0
  %v380 = vpop.f32.mrb[0].mxu0
  %v381 = vadd.f32 %v284, %v380
  %v382 = vpop.f32.mrb[0].mxu0
  %383 = vdwg.mxu0
  %v384 = vpack.c.bf16 %v150, %v149
  %v385 = vpack.c.bf16 %v152, %v151
  %s386 = scalar_lea.vmem %s1, 128
  %v387 = vld [vmem:[%s386] sm:$0xf]
  %v388 = vld [vmem:[%s386 + $0x4] sm:$0xf]
  %v389 = vld [vmem:[%s386 + $0x8] sm:$0xf]
  %v390 = vld [vmem:[%s386 + $0xc] sm:$0xf]
  %v391 = vld [vmem:[%s386 + $0x10] sm:$0xf]
  %v392 = vld [vmem:[%s386 + $0x14] sm:$0xf]
  %v393 = vld [vmem:[%s386 + $0x18] sm:$0xf]
  %v394 = vld [vmem:[%s386 + $0x1c] sm:$0xf]
  %v395 = vld [vmem:[%s386 + $0x20] sm:$0xf]
  %v396 = vld [vmem:[%s386 + $0x24] sm:$0xf]
  %v397 = vld [vmem:[%s386 + $0x28] sm:$0xf]
  %v398 = vld [vmem:[%s386 + $0x2c] sm:$0xf]
  %v399 = vld [vmem:[%s386 + $0x30] sm:$0xf]
  %v400 = vld [vmem:[%s386 + $0x34] sm:$0xf]
  %v401 = vld [vmem:[%s386 + $0x38] sm:$0xf]
  %v402 = vld [vmem:[%s386 + $0x3c] sm:$0xf]
  %v419 = vunpack.c.l.b16 %v387
  %v420 = vunpack.c.l.b16 %v388
  %v421 = vunpack.c.l.b16 %v389
  %v422 = vunpack.c.l.b16 %v390
  %v423 = vunpack.c.l.b16 %v391
  %v424 = vunpack.c.l.b16 %v392
  %v425 = vunpack.c.l.b16 %v393
  %v426 = vunpack.c.l.b16 %v394
  %v427 = vunpack.c.l.b16 %v395
  %v428 = vunpack.c.l.b16 %v396
  %v429 = vunpack.c.l.b16 %v397
  %v430 = vunpack.c.l.b16 %v398
  %v431 = vunpack.c.l.b16 %v399
  %v432 = vunpack.c.l.b16 %v400
  %v433 = vunpack.c.l.b16 %v401
  %v434 = vunpack.c.l.b16 %v402
  %v435 = vpack.c.b16 %v420, %v419
  %v436 = vpack.c.b16 %v422, %v421
  %v437 = vpack.c.b16 %v424, %v423
  %v438 = vpack.c.b16 %v426, %v425
  %v439 = vpack.c.b16 %v428, %v427
  %v440 = vpack.c.b16 %v430, %v429
  %v441 = vpack.c.b16 %v432, %v431
  %v442 = vpack.c.b16 %v434, %v433
  %451 = vmatprep.subr.bf16.mxu0 0
  %452 = vmatpush1.bf16.msra.mxu0 %v435
  %453 = vmatprep.subr.bf16.mxu0 0
  %454 = vmatpush1.bf16.msra.mxu0 %v436
  %455 = vmatprep.subr.bf16.mxu0 0
  %456 = vmatpush1.bf16.msra.mxu0 %v437
  %457 = vmatprep.subr.bf16.mxu0 0
  %458 = vmatpush1.bf16.msra.mxu0 %v438
  %459 = vmatprep.subr.bf16.mxu0 0
  %460 = vmatpush1.bf16.msra.mxu0 %v439
  %461 = vmatprep.subr.bf16.mxu0 0
  %462 = vmatpush1.bf16.msra.mxu0 %v440
  %463 = vmatprep.subr.bf16.mxu0 0
  %464 = vmatpush1.bf16.msra.mxu0 %v441
  %465 = vmatprep.subr.bf16.mxu0 0
  %466 = vmatpush1.bf16.msra.mxu0 %v442
  %467 = vmatprep.subr.bf16.mxu0 0
  %468 = vmatpush1.bf16.msra.mxu0 0
  %469 = vmatprep.subr.bf16.mxu0 0
  %470 = vmatpush1.bf16.msra.mxu0 0
  %471 = vmatprep.subr.bf16.mxu0 0
  %472 = vmatpush1.bf16.msra.mxu0 0
  %473 = vmatprep.subr.bf16.mxu0 0
  %474 = vmatpush1.bf16.msra.mxu0 0
  %475 = vmatprep.subr.bf16.mxu0 0
  %476 = vmatpush1.bf16.msra.mxu0 0
  %477 = vmatprep.subr.bf16.mxu0 0
  %478 = vmatpush1.bf16.msra.mxu0 0
  %479 = vmatprep.subr.bf16.mxu0 0
  %480 = vmatpush1.bf16.msra.mxu0 0
  %481 = vmatprep.subr.bf16.mxu0 0
  %482 = vmatpush1.bf16.msra.mxu0 0
  %483 = vmatprep.mubr.bf16.mxu0 0
  %484 = vmatmul.mubr.bf16.gmra.mrb[0].mxu0 %v384
  %v485 = vpop.f32.mrb[0].mxu0
  %v486 = vadd.f32 0.0, %v485
  %v487 = vpop.f32.mrb[0].mxu0
  %v488 = vpop.f32.mrb[0].mxu0
  %v489 = vadd.f32 0.0, %v488
  %v490 = vpop.f32.mrb[0].mxu0
  %491 = vmatprep.mubr.bf16.mxu0 0
  %492 = vmatmul.mubr.bf16.gmra.mrb[0].mxu0 %v385
  %v493 = vpop.f32.mrb[0].mxu0
  %v494 = vadd.f32 0.0, %v493
  %v495 = vpop.f32.mrb[0].mxu0
  %v496 = vpop.f32.mrb[0].mxu0
  %v497 = vadd.f32 0.0, %v496
  %v498 = vpop.f32.mrb[0].mxu0
  %499 = vdwg.mxu0
  %v500 = vadd.f32 %v370, %v486
  %v501 = vadd.f32 %v373, %v489
  %v502 = vadd.f32 %v378, %v494
  %v503 = vadd.f32 %v381, %v497
  %504 = vst [vmem:[%s4] sm:$0xff] %v500
  %505 = vst [vmem:[%s4 + $0x8] sm:$0xff] %v501
  %506 = vst [vmem:[%s4 + $0x10] sm:$0xff] %v502
  %507 = vst [vmem:[%s4 + $0x18] sm:$0xff] %v503
  %v508 = vadd.f32 %v500, %v501
  %v509 = vadd.f32 %v508, %v502
  %v510 = vadd.f32 %v509, %v503
  %v511 = vrot.slane %v510, 4
  %v512 = vadd.f32 %v510, %v511
  %v513 = vrot.slane %v512, 2
  %v514 = vadd.f32 %v512, %v513
  %v515 = vrot.slane %v514, 1
  %v516 = vadd.f32 %v514, %v515
  %v517 = vmul.f32 %v500, %v500
  %v518 = vmul.f32 %v501, %v501
  %v519 = vmul.f32 %v502, %v502
  %v520 = vmul.f32 %v503, %v503
  %v521 = vadd.f32 %v517, %v518
  %v522 = vadd.f32 %v521, %v519
  %v523 = vadd.f32 %v522, %v520
  %v524 = vrot.slane %v523, 4
  %v525 = vadd.f32 %v523, %v524
  %v526 = vrot.slane %v525, 2
  %v527 = vadd.f32 %v525, %v526
  %v528 = vrot.slane %v527, 1
  %v529 = vadd.f32 %v527, %v528
  %v530 = vsel %vm115, %v516, %v529
  %531 = vst [vmem:[%s5] sm:$0x3] %v530
  // Predicated region
  $region18: #{model1_forward.3} parent=0 // pred_check
    _
  $region19: #{model1_forward.3} parent=0 // pred_check_branch
    %533 = sbr.rel (0) target = $region21
  $region20: #{model1_forward.3} parent=0 // pred_region
    _
  $region21: #{model1_forward.3} parent=0 // pred_fallthru
    _
  // Predicated region
  $region22: #{model1_forward.3} parent=0 // pred_check
    _
  $region23: #{model1_forward.3} parent=0 // pred_check_branch
    %535 = sbr.rel (0) target = $region25
  $region24: #{model1_forward.3} parent=0 // pred_region
    _
  $region25: #{model1_forward.3} parent=0 // pred_fallthru
    _
  // Predicated region
  $region26: #{model1_forward.3} parent=0 // pred_check
    _
  $region27: #{model1_forward.3} parent=0 // pred_check_branch
    %537 = sbr.rel (0) target = $region29
  $region28: #{model1_forward.3} parent=0 // pred_region
    _
  $region29: #{model1_forward.3} parent=0 // pred_fallthru
    _
  // Predicated region
  $region30: #{model1_forward.3} parent=0 // pred_check
    _
  $region31: #{model1_forward.3} parent=0 // pred_check_branch
    %539 = sbr.rel (0) target = $region33
  $region32: #{model1_forward.3} parent=0 // pred_region
    _
  $region33: #{model1_forward.3} parent=0 // pred_fallthru
    _

</llo_original>
